<compile_context>
chip_gen: v5e
topology: v5e:2x2
jax: 0.10.0
libtpu: 0.0.40
codegen_flags: <defaults>
</compile_context>

<pallas_src>
import functools

import jax
import jax.numpy as jnp
from jax.experimental import pallas as pl
from jax.experimental.pallas import tpu as pltpu


def _round_up(n, m):
    return ((n + m - 1) // m) * m


def dqn_kernel(x_ref, w_ref, b_ref, o_ref, *, dims):
    """One batch tile of the fused 4-layer MLP.

    x_ref : (TILE_B, IN_PAD)                  bf16   batch tile
    w_ref : (IN_PAD+H1+H2+H3P, WIDTH)         bf16   packed weights (VMEM-resident)
    b_ref : (4, WIDTH)                        f32    packed biases  (VMEM-resident)
    o_ref : (TILE_B, A_PAD)                   bf16   lane-dense output (A_PAD % 128 == 0)

    All lane slices below are 128-aligned (h1=256, h2=128, h3=128 padded,
    a_pad=128), so every matmul operand is lane-dense.
    """
    in_pad, h1, h2, h3, a_pad = (dims["in_pad"], dims["h1"], dims["h2"],
                                 dims["h3"], dims["a_pad"])
    r2 = in_pad          # start row of W2 block
    r3 = r2 + h1         # start row of W3 block
    r4 = r3 + h2         # start row of W4 block

    b = b_ref[...]       # load all biases once (f32)
    x = x_ref[...]       # bf16

    # Layer 1: (TB, in) @ (in, 256) + b1, ReLU   (bf16 MXU, f32 accumulate)
    h = jnp.dot(x, w_ref[0:r2, 0:h1], preferred_element_type=jnp.float32)
    h = jnp.maximum(h + b[0:1, 0:h1], 0.0)
    # Layer 2: (TB, 256) @ (256, 128) + b2, ReLU
    h = jnp.dot(h.astype(jnp.bfloat16), w_ref[r2:r3, 0:h2],
                preferred_element_type=jnp.float32)
    h = jnp.maximum(h + b[1:2, 0:h2], 0.0)
    # Layer 3: (TB, 128) @ (128, 128-padded) + b3, ReLU   (cols 64..127 are zero)
    h = jnp.dot(h.astype(jnp.bfloat16), w_ref[r3:r4, 0:h3],
                preferred_element_type=jnp.float32)
    h = jnp.maximum(h + b[2:3, 0:h3], 0.0)
    # Layer 4 (head, zero-padded to a_pad lanes, no activation); padded input
    # rows of W4 are zero so the padded layer-3 lanes contribute nothing.
    h = jnp.dot(h.astype(jnp.bfloat16), w_ref[r4:r4 + h3, 0:a_pad],
                preferred_element_type=jnp.float32)
    o_ref[...] = (h + b[3:4, 0:a_pad]).astype(o_ref.dtype)


def init_dqn_params(key, input_size, action_size):
    """PyTorch nn.Linear-style init: U(-1/sqrt(fan_in), 1/sqrt(fan_in)).

    Weights stored as (in_features, out_features) so y = x @ W + b.
    """
    layer_dims = [(input_size, 256), (256, 128), (128, 64), (64, action_size)]
    params = {}
    for i, (fan_in, fan_out) in enumerate(layer_dims, start=1):
        key, kw, kb = jax.random.split(key, 3)
        bound = 1.0 / jnp.sqrt(jnp.float32(fan_in))
        params[f"w{i}"] = jax.random.uniform(
            kw, (fan_in, fan_out), jnp.float32, minval=-bound, maxval=bound)
        params[f"b{i}"] = jax.random.uniform(
            kb, (1, fan_out), jnp.float32, minval=-bound, maxval=bound)
    return params


def pack_dqn_params(params, input_size, action_size):
    """Pack 4 weights into one bf16 slab and 4 biases into one f32 buffer.

    Layer-3 width is zero-padded 64 -> 128 so every in-kernel lane slice is
    128-aligned (zeros propagate harmlessly through ReLU and the zero W4 rows).
    """
    h1, h2, h3_real = 256, 128, 64
    h3 = 128                                       # padded layer-3 width
    in_pad = _round_up(input_size, 16)             # bf16 sublane-tile alignment
    a_pad = _round_up(max(action_size, 1), 128)    # lane-dense output head
    width = max(h1, h2, h3, a_pad)
    rows = in_pad + h1 + h2 + h3

    r2 = in_pad
    r3 = r2 + h1
    r4 = r3 + h2

    w = jnp.zeros((rows, width), jnp.float32)
    w = w.at[0:input_size, 0:h1].set(params["w1"])
    w = w.at[r2:r2 + h1, 0:h2].set(params["w2"])
    w = w.at[r3:r3 + h2, 0:h3_real].set(params["w3"])
    w = w.at[r4:r4 + h3_real, 0:action_size].set(params["w4"])

    b = jnp.zeros((4, width), jnp.float32)
    b = b.at[0, 0:h1].set(params["b1"][0])
    b = b.at[1, 0:h2].set(params["b2"][0])
    b = b.at[2, 0:h3_real].set(params["b3"][0])
    b = b.at[3, 0:action_size].set(params["b4"][0])

    dims = dict(in_size=input_size, in_pad=in_pad, h1=h1, h2=h2, h3=h3,
                a=action_size, a_pad=a_pad, width=width, rows=rows)
    return w.astype(jnp.bfloat16), b, dims


def make_dqn_forward(dims):
    """Returns a jitted forward fn; packed params stay device-resident."""
    in_size, in_pad = dims["in_size"], dims["in_pad"]
    a, a_pad = dims["a"], dims["a_pad"]
    rows, width = dims["rows"], dims["width"]

    @jax.jit
    def fwd(x, w_packed, b_packed):
        batch = x.shape[0]
        b16 = _round_up(batch, 16)
        if batch >= 256:
            # Keep >= 2 grid steps so the "parallel" batch axis can shard
            # across both v7x TensorCores; cap tile at 512 rows.
            tile_b = min(512, max(16, _round_up(pl.cdiv(b16, 2), 16)))
        else:
            tile_b = min(512, b16)
        b_pad = _round_up(batch, tile_b)

        x_p = jnp.zeros((b_pad, in_pad), jnp.bfloat16)
        x_p = x_p.at[:batch, :in_size].set(x.astype(jnp.bfloat16))

        out = pl.pallas_call(
            functools.partial(dqn_kernel, dims=dims),
            out_shape=jax.ShapeDtypeStruct((b_pad, a_pad), jnp.bfloat16),
            grid=(b_pad // tile_b,),
            in_specs=[
                pl.BlockSpec((tile_b, in_pad), lambda i: (i, 0)),  # x: batch-tiled
                pl.BlockSpec((rows, width), lambda i: (0, 0)),     # weights: resident
                pl.BlockSpec((4, width), lambda i: (0, 0)),        # biases: resident
            ],
            out_specs=pl.BlockSpec((tile_b, a_pad), lambda i: (i, 0)),
            compiler_params=pltpu.CompilerParams(
                dimension_semantics=("parallel",)),
        )(x_p, w_packed, b_packed)
        # Slice off padding; return f32 Q-values to match the PyTorch module.
        return out[:batch, :a].astype(jnp.float32)

    return fwd


def dqn_forward_ref(x, params):
    """Pure-JAX reference mimicking the kernel's bf16-MXU / f32-accumulate math."""
    def lin(h, w, b):
        return jnp.dot(h.astype(jnp.bfloat16), w.astype(jnp.bfloat16),
                       preferred_element_type=jnp.float32) + b
    h = jnp.maximum(lin(x, params["w1"], params["b1"]), 0.0)
    h = jnp.maximum(lin(h, params["w2"], params["b2"]), 0.0)
    h = jnp.maximum(lin(h, params["w3"], params["b3"]), 0.0)
    return lin(h, params["w4"], params["b4"])


if __name__ == "__main__":
    key = jax.random.PRNGKey(0)
    key_params, key_x, key_x2 = jax.random.split(key, 3)

    batch = 2
    input_size = 16
    action_size = 8

    params = init_dqn_params(key_params, input_size, action_size)
    w_packed, b_packed, dims = pack_dqn_params(params, input_size, action_size)
    dqn_forward = make_dqn_forward(dims)

    # Small inference batch (B=2, padded to 16 rows internally, single grid step).
    x = jax.random.normal(key_x, (batch, input_size), jnp.float32)
    out = jax.block_until_ready(dqn_forward(x, w_packed, b_packed))
    ref = dqn_forward_ref(x, params)
    assert out.shape == (batch, action_size)
    assert jnp.allclose(out, ref, atol=2e-2, rtol=2e-2), "mismatch vs reference (B=2)"

    # Replay-buffer-sized batch exercises the >=2-step grid path (grid=(2,), tile_b=128).
    x_big = jax.random.normal(key_x2, (256, input_size), jnp.float32)
    out_big = jax.block_until_ready(dqn_forward(x_big, w_packed, b_packed))
    ref_big = dqn_forward_ref(x_big, params)
    assert out_big.shape == (256, action_size)
    assert jnp.allclose(out_big, ref_big, atol=2e-2, rtol=2e-2), "mismatch vs reference (B=256)"

    print("KERNEL_OK")
</pallas_src>

<mosaic_0001>
module attributes {stable_mosaic.version = 11 : i64} {
  func.func @dqn_kernel(%arg0: i32, %arg1: memref<16x16xbf16, #tpu.memory_space<vmem>>, %arg2: memref<528x256xbf16, #tpu.memory_space<vmem>>, %arg3: memref<4x256xf32, #tpu.memory_space<vmem>>, %arg4: memref<16x128xbf16, #tpu.memory_space<vmem>>) attributes {dimension_semantics = [#tpu.dimension_semantics<parallel>], iteration_bounds = array<i64: 1>, scalar_prefetch = 0 : i64, scratch_operands = 0 : i64, tpu.core_type = #tpu.core_type<tc>, window_params = [{transform_indices = @transform_0, window_bounds = array<i64: 16, 16>}, {pipeline_mode = #tpu.pipeline_mode<synchronous>, transform_indices = @transform_1, window_bounds = array<i64: 528, 256>}, {pipeline_mode = #tpu.pipeline_mode<synchronous>, transform_indices = @transform_2, window_bounds = array<i64: 4, 256>}, {transform_indices = @transform_3, window_bounds = array<i64: 16, 128>}]} {
    %c0 = arith.constant 0 : index
    %c0_0 = arith.constant 0 : index
    %0 = vector.load %arg3[%c0, %c0_0] : memref<4x256xf32, #tpu.memory_space<vmem>>, vector<4x256xf32>
    %c0_1 = arith.constant 0 : index
    %c0_2 = arith.constant 0 : index
    %1 = vector.load %arg1[%c0_1, %c0_2] : memref<16x16xbf16, #tpu.memory_space<vmem>>, vector<16x16xbf16>
    %c0_3 = arith.constant 0 : index
    %c0_4 = arith.constant 0 : index
    %2 = vector.load %arg2[%c0_3, %c0_4] : memref<528x256xbf16, #tpu.memory_space<vmem>>, vector<16x256xbf16>
    %cst = arith.constant dense<0.000000e+00> : vector<16x256xf32>
    %3 = tpu.matmul %1, %2, %cst {dimension_numbers = #tpu.dot_dimension_numbers<[1], [0], [0], [1], [0, 0, 1, 1], [], []>} : vector<16x16xbf16>, vector<16x256xbf16>, vector<16x256xf32> -> vector<16x256xf32>
    %4 = vector.extract_strided_slice %0 {offsets = [0, 0], sizes = [1, 256], strides = [1, 1]} : vector<4x256xf32> to vector<1x256xf32>
    %5 = vector.broadcast %4 : vector<1x256xf32> to vector<16x256xf32>
    %6 = arith.addf %3, %5 : vector<16x256xf32>
    %cst_5 = arith.constant 0.000000e+00 : f32
    %7 = vector.broadcast %cst_5 : f32 to vector<16x256xf32>
    %8 = arith.maximumf %6, %7 : vector<16x256xf32>
    %9 = arith.truncf %8 : vector<16x256xf32> to vector<16x256xbf16>
    %c16 = arith.constant 16 : index
    %c0_6 = arith.constant 0 : index
    %10 = vector.load %arg2[%c16, %c0_6] : memref<528x256xbf16, #tpu.memory_space<vmem>>, vector<256x128xbf16>
    %cst_7 = arith.constant dense<0.000000e+00> : vector<16x128xf32>
    %11 = tpu.matmul %9, %10, %cst_7 {dimension_numbers = #tpu.dot_dimension_numbers<[1], [0], [0], [1], [0, 0, 1, 1], [], []>} : vector<16x256xbf16>, vector<256x128xbf16>, vector<16x128xf32> -> vector<16x128xf32>
    %12 = vector.extract_strided_slice %0 {offsets = [1, 0], sizes = [1, 128], strides = [1, 1]} : vector<4x256xf32> to vector<1x128xf32>
    %13 = vector.broadcast %12 : vector<1x128xf32> to vector<16x128xf32>
    %14 = arith.addf %11, %13 : vector<16x128xf32>
    %cst_8 = arith.constant 0.000000e+00 : f32
    %15 = vector.broadcast %cst_8 : f32 to vector<16x128xf32>
    %16 = arith.maximumf %14, %15 : vector<16x128xf32>
    %17 = arith.truncf %16 : vector<16x128xf32> to vector<16x128xbf16>
    %c272 = arith.constant 272 : index
    %c0_9 = arith.constant 0 : index
    %18 = vector.load %arg2[%c272, %c0_9] : memref<528x256xbf16, #tpu.memory_space<vmem>>, vector<128x128xbf16>
    %cst_10 = arith.constant dense<0.000000e+00> : vector<16x128xf32>
    %19 = tpu.matmul %17, %18, %cst_10 {dimension_numbers = #tpu.dot_dimension_numbers<[1], [0], [0], [1], [0, 0, 1, 1], [], []>} : vector<16x128xbf16>, vector<128x128xbf16>, vector<16x128xf32> -> vector<16x128xf32>
    %20 = vector.extract_strided_slice %0 {offsets = [2, 0], sizes = [1, 128], strides = [1, 1]} : vector<4x256xf32> to vector<1x128xf32>
    %21 = vector.broadcast %20 : vector<1x128xf32> to vector<16x128xf32>
    %22 = arith.addf %19, %21 : vector<16x128xf32>
    %cst_11 = arith.constant 0.000000e+00 : f32
    %23 = vector.broadcast %cst_11 : f32 to vector<16x128xf32>
    %24 = arith.maximumf %22, %23 : vector<16x128xf32>
    %25 = arith.truncf %24 : vector<16x128xf32> to vector<16x128xbf16>
    %c400 = arith.constant 400 : index
    %c0_12 = arith.constant 0 : index
    %26 = vector.load %arg2[%c400, %c0_12] : memref<528x256xbf16, #tpu.memory_space<vmem>>, vector<128x128xbf16>
    %cst_13 = arith.constant dense<0.000000e+00> : vector<16x128xf32>
    %27 = tpu.matmul %25, %26, %cst_13 {dimension_numbers = #tpu.dot_dimension_numbers<[1], [0], [0], [1], [0, 0, 1, 1], [], []>} : vector<16x128xbf16>, vector<128x128xbf16>, vector<16x128xf32> -> vector<16x128xf32>
    %28 = vector.extract_strided_slice %0 {offsets = [3, 0], sizes = [1, 128], strides = [1, 1]} : vector<4x256xf32> to vector<1x128xf32>
    %29 = vector.broadcast %28 : vector<1x128xf32> to vector<16x128xf32>
    %30 = arith.addf %27, %29 : vector<16x128xf32>
    %31 = arith.truncf %30 : vector<16x128xf32> to vector<16x128xbf16>
    %c0_14 = arith.constant 0 : index
    %c0_15 = arith.constant 0 : index
    %32 = vector.load %arg4[%c0_14, %c0_15] : memref<16x128xbf16, #tpu.memory_space<vmem>>, vector<16x128xbf16>
    tpu.vector_store %arg4[%c0_14, %c0_15], %31 {strides = array<i32>} : memref<16x128xbf16, #tpu.memory_space<vmem>>, vector<16x128xbf16>,
    return
  }
  func.func @transform_0(%arg0: i32) -> (i32, i32) {
    %c0_i32 = arith.constant 0 : i32
    %c0_i32_0 = arith.constant 0 : i32
    return %arg0, %c0_i32 : i32, i32
  }
  func.func @transform_1(%arg0: i32) -> (i32, i32) {
    %c0_i32 = arith.constant 0 : i32
    %c0_i32_0 = arith.constant 0 : i32
    %c0_i32_1 = arith.constant 0 : i32
    return %c0_i32, %c0_i32_0 : i32, i32
  }
  func.func @transform_2(%arg0: i32) -> (i32, i32) {
    %c0_i32 = arith.constant 0 : i32
    %c0_i32_0 = arith.constant 0 : i32
    %c0_i32_1 = arith.constant 0 : i32
    return %c0_i32, %c0_i32_0 : i32, i32
  }
  func.func @transform_3(%arg0: i32) -> (i32, i32) {
    %c0_i32 = arith.constant 0 : i32
    %c0_i32_0 = arith.constant 0 : i32
    return %arg0, %c0_i32 : i32, i32
  }
}

</mosaic_0001>

<llo_original>
// kernel: fwd.1
$region0: #{fwd.1}
  #allocation0 [shape = 'u32[]', space=smem, size = 0x4, offset = 0x4, fixed_abs, tag = 'smem constant byte address 0x4 - core index']
  #allocation1 [shape = 'u32[72,128]{1,0:T(1,128)}', space=vmem, size = 0x9000, scoped, tag = 'internal scratch']
  %s0 = inlined_call_operand.vmem [shape: bf16[16,16], index: 0, kind: input, shape index: {}]
  %s1 = inlined_call_operand.hbm [shape: bf16[528,256], index: 1, kind: input, shape index: {}]
  %s2 = inlined_call_operand.vmem [shape: f32[4,256], index: 2, kind: input, shape index: {}]
  %s3 = inlined_call_operand.vmem [shape: bf16[16,128], index: 3, kind: output, shape index: {}]
  %s4 = sld [smem:[#allocation0]]
  $region26: #{fwd.1} parent=0
    _
  %s6 = ssub.s32 1, %s4
  %s7 = scalar_select 0, %s6, %s4
  $region1: #{fwd.1} parent=0
    #allocation2 [shape = 'u8[270336]{0}', space=vmem, size = 0x42000, scoped, tag = 'input window, operand 1, single buffered']
    #allocation3 [shape = 's32[1]{0}', space=sflag, size = 0x4, scoped, tag = 'scoped memory for fwd.1']
    %8 = vsyncpa [#allocation3], 0
    // Predicated region
    $region2: #{fwd.1} parent=1 // pred_check
      _
    $region3: #{fwd.1} parent=1 // pred_check_branch
      %10 = sbr.rel (0) target = $region5
    $region4: #{fwd.1} parent=1 // pred_region
      _
    $region5: #{fwd.1} parent=1 // pred_fallthru
      _
    // Predicated region
    $region6: #{fwd.1} parent=1 // pred_check
      _
    $region7: #{fwd.1} parent=1 // pred_check_branch
      %12 = sbr.rel (0) target = $region9
    $region8: #{fwd.1} parent=1 // pred_region
      %14 = vsyncadd [#allocation3], 0
      %s15 = sshll.u32 %s1, 4
      %s16 = int_to_ptr.hbm [resolvable:$true] %s15
      %s17 = sshll.u32 [#allocation2], 4
      %s18 = int_to_ptr.vmem [resolvable:$true] %s17
      %23 = dma.hbm_to_vmem [thread:$0]  %s16, 8448, %s18, [#allocation3], 128, 128, 8
    $region9: #{fwd.1} parent=1 // pred_fallthru
      _
    // Predicated region
    $region10: #{fwd.1} parent=1 // pred_check
      _
    $region11: #{fwd.1} parent=1 // pred_check_branch
      %25 = sbr.rel (0) target = $region13
    $region12: #{fwd.1} parent=1 // pred_region
      _
    $region13: #{fwd.1} parent=1 // pred_fallthru
      _
    // Predicated region
    $region14: #{fwd.1} parent=1 // pred_check
      _
    $region15: #{fwd.1} parent=1 // pred_check_branch
      %27 = sbr.rel (0) target = $region17
    $region16: #{fwd.1} parent=1 // pred_region
      %29 = dma.done [#allocation3], 8448
    $region17: #{fwd.1} parent=1 // pred_fallthru
      _
    %v31 = vld [vmem:[%s2] sm:$0xff]
    %v32 = vld [vmem:[%s0] sm:$0xf]
    %v33 = vld [vmem:[%s0 + $0x4] sm:$0xf]
    %v34 = vld [vmem:[#allocation2] sm:$0xff]
    %v35 = vld [vmem:[#allocation2 + $0x8] sm:$0xff]
    %v37 = vperm.slane %v31, 0
    %v38 = vperm.slane %v31, 4
    %v41 = vperm.slane %v37, 0
    %v42 = vperm.slane %v38, 0
    %v45 = vunpack.c.l.b16 %v32
    %v46 = vunpack.c.l.b16 %v33
    %v47 = vpack.c.b16 %v46, %v45
    %v50 = vunpack.c.l.b16 %v34
    %v51 = vunpack.c.h.b16 %v34
    %v52 = vunpack.c.l.b16 %v35
    %v53 = vunpack.c.h.b16 %v35
    %v54 = vpack.c.b16 %v52, %v50
    %v55 = vpack.c.b16 %v53, %v51
    %vm58 = vcmask 130048
    %v60 = vsel %vm58, %v47, 0
    %62 = vmatpush.bf16.msra.mxu0 0
    %63 = vmatpush.bf16.msra.mxu0 0
    %64 = vmatpush.bf16.msra.mxu0 0
    %65 = vmatpush.bf16.msra.mxu0 0
    %66 = vmatpush.bf16.msra.mxu0 0
    %67 = vmatpush.bf16.msra.mxu0 0
    %68 = vmatpush.bf16.msra.mxu0 0
    %69 = vmatpush.bf16.msra.mxu0 %v54
    %70 = vmatmul.bf16.gmra.mxu0 %v60
    %v71 = vpop.f32.mrf.mxu0
    %v72 = vadd.f32 %v41, %v71
    %v73 = vpop.f32.mrf.mxu0
    %v74 = vadd.f32 %v41, %v73
    %75 = vdwg.mxu0
    %76 = vmatpush.bf16.msra.mxu0 0
    %77 = vmatpush.bf16.msra.mxu0 0
    %78 = vmatpush.bf16.msra.mxu0 0
    %79 = vmatpush.bf16.msra.mxu0 0
    %80 = vmatpush.bf16.msra.mxu0 0
    %81 = vmatpush.bf16.msra.mxu0 0
    %82 = vmatpush.bf16.msra.mxu0 0
    %83 = vmatpush.bf16.msra.mxu0 %v55
    %84 = vmatmul.bf16.gmra.mxu0 %v60
    %v85 = vpop.f32.mrf.mxu0
    %v86 = vadd.f32 %v42, %v85
    %v87 = vpop.f32.mrf.mxu0
    %v88 = vadd.f32 %v42, %v87
    %89 = vdwg.mxu0
    %v90 = vmax.f32 %v72, 0.0
    %v91 = vmax.f32 %v86, 0.0
    %v92 = vmax.f32 %v74, 0.0
    %v93 = vmax.f32 %v88, 0.0
    %v94 = vpack.c.bf16 %v92, %v90
    %v95 = vpack.c.bf16 %v93, %v91
    %v96 = vld [vmem:[#allocation2 + $0x10] sm:$0xf]
    %v97 = vld [vmem:[#allocation2 + $0x18] sm:$0xf]
    %v98 = vld [vmem:[#allocation2 + $0x20] sm:$0xf]
    %v99 = vld [vmem:[#allocation2 + $0x28] sm:$0xf]
    %v100 = vld [vmem:[#allocation2 + $0x30] sm:$0xf]
    %v101 = vld [vmem:[#allocation2 + $0x38] sm:$0xf]
    %v102 = vld [vmem:[#allocation2 + $0x40] sm:$0xf]
    %v103 = vld [vmem:[#allocation2 + $0x48] sm:$0xf]
    %v104 = vld [vmem:[#allocation2 + $0x50] sm:$0xf]
    %v105 = vld [vmem:[#allocation2 + $0x58] sm:$0xf]
    %v106 = vld [vmem:[#allocation2 + $0x60] sm:$0xf]
    %v107 = vld [vmem:[#allocation2 + $0x68] sm:$0xf]
    %v108 = vld [vmem:[#allocation2 + $0x70] sm:$0xf]
    %v109 = vld [vmem:[#allocation2 + $0x78] sm:$0xf]
    %v110 = vld [vmem:[#allocation2 + $0x80] sm:$0xf]
    %v111 = vld [vmem:[#allocation2 + $0x88] sm:$0xf]
    %v112 = vld [vmem:[#allocation2 + $0x90] sm:$0xf]
    %v113 = vld [vmem:[#allocation2 + $0x98] sm:$0xf]
    %v114 = vld [vmem:[#allocation2 + $0xa0] sm:$0xf]
    %v115 = vld [vmem:[#allocation2 + $0xa8] sm:$0xf]
    %v116 = vld [vmem:[#allocation2 + $0xb0] sm:$0xf]
    %v117 = vld [vmem:[#allocation2 + $0xb8] sm:$0xf]
    %v118 = vld [vmem:[#allocation2 + $0xc0] sm:$0xf]
    %v119 = vld [vmem:[#allocation2 + $0xc8] sm:$0xf]
    %v120 = vld [vmem:[#allocation2 + $0xd0] sm:$0xf]
    %v121 = vld [vmem:[#allocation2 + $0xd8] sm:$0xf]
    %v122 = vld [vmem:[#allocation2 + $0xe0] sm:$0xf]
    %v123 = vld [vmem:[#allocation2 + $0xe8] sm:$0xf]
    %v124 = vld [vmem:[#allocation2 + $0xf0] sm:$0xf]
    %v125 = vld [vmem:[#allocation2 + $0xf8] sm:$0xf]
    %v126 = vld [vmem:[#allocation2 + $0x100] sm:$0xf]
    %v127 = vld [vmem:[#allocation2 + $0x108] sm:$0xf]
    %v128 = vperm.slane %v31, 1
    %v161 = vunpack.c.l.b16 %v96
    %v162 = vunpack.c.l.b16 %v97
    %v163 = vunpack.c.l.b16 %v98
    %v164 = vunpack.c.l.b16 %v99
    %v165 = vunpack.c.l.b16 %v100
    %v166 = vunpack.c.l.b16 %v101
    %v167 = vunpack.c.l.b16 %v102
    %v168 = vunpack.c.l.b16 %v103
    %v169 = vunpack.c.l.b16 %v104
    %v170 = vunpack.c.l.b16 %v105
    %v171 = vunpack.c.l.b16 %v106
    %v172 = vunpack.c.l.b16 %v107
    %v173 = vunpack.c.l.b16 %v108
    %v174 = vunpack.c.l.b16 %v109
    %v175 = vunpack.c.l.b16 %v110
    %v176 = vunpack.c.l.b16 %v111
    %v177 = vunpack.c.l.b16 %v112
    %v178 = vunpack.c.l.b16 %v113
    %v179 = vunpack.c.l.b16 %v114
    %v180 = vunpack.c.l.b16 %v115
    %v181 = vunpack.c.l.b16 %v116
    %v182 = vunpack.c.l.b16 %v117
    %v183 = vunpack.c.l.b16 %v118
    %v184 = vunpack.c.l.b16 %v119
    %v185 = vunpack.c.l.b16 %v120
    %v186 = vunpack.c.l.b16 %v121
    %v187 = vunpack.c.l.b16 %v122
    %v188 = vunpack.c.l.b16 %v123
    %v189 = vunpack.c.l.b16 %v124
    %v190 = vunpack.c.l.b16 %v125
    %v191 = vunpack.c.l.b16 %v126
    %v192 = vunpack.c.l.b16 %v127
    %v193 = vpack.c.b16 %v162, %v161
    %v194 = vpack.c.b16 %v164, %v163
    %v195 = vpack.c.b16 %v166, %v165
    %v196 = vpack.c.b16 %v168, %v167
    %v197 = vpack.c.b16 %v170, %v169
    %v198 = vpack.c.b16 %v172, %v171
    %v199 = vpack.c.b16 %v174, %v173
    %v200 = vpack.c.b16 %v176, %v175
    %v201 = vpack.c.b16 %v178, %v177
    %v202 = vpack.c.b16 %v180, %v179
    %v203 = vpack.c.b16 %v182, %v181
    %v204 = vpack.c.b16 %v184, %v183
    %v205 = vpack.c.b16 %v186, %v185
    %v206 = vpack.c.b16 %v188, %v187
    %v207 = vpack.c.b16 %v190, %v189
    %v208 = vpack.c.b16 %v192, %v191
    %225 = vmatpush.bf16.msra.mxu0 %v200
    %226 = vmatpush.bf16.msra.mxu0 %v199
    %227 = vmatpush.bf16.msra.mxu0 %v198
    %228 = vmatpush.bf16.msra.mxu0 %v197
    %229 = vmatpush.bf16.msra.mxu0 %v196
    %230 = vmatpush.bf16.msra.mxu0 %v195
    %231 = vmatpush.bf16.msra.mxu0 %v194
    %232 = vmatpush.bf16.msra.mxu0 %v193
    %233 = vmatmul.bf16.gmra.mxu0 %v94
    %v234 = vpop.f32.mrf.mxu0
    %v235 = vadd.f32 %v128, %v234
    %v236 = vpop.f32.mrf.mxu0
    %v237 = vadd.f32 %v128, %v236
    %238 = vdwg.mxu0
    %239 = vmatpush.bf16.msra.mxu0 %v208
    %240 = vmatpush.bf16.msra.mxu0 %v207
    %241 = vmatpush.bf16.msra.mxu0 %v206
    %242 = vmatpush.bf16.msra.mxu0 %v205
    %243 = vmatpush.bf16.msra.mxu0 %v204
    %244 = vmatpush.bf16.msra.mxu0 %v203
    %245 = vmatpush.bf16.msra.mxu0 %v202
    %246 = vmatpush.bf16.msra.mxu0 %v201
    %247 = vmatmul.bf16.gmra.mxu0 %v95
    %v248 = vpop.f32.mrf.mxu0
    %v249 = vadd.f32 %v235, %v248
    %v250 = vpop.f32.mrf.mxu0
    %v251 = vadd.f32 %v237, %v250
    %252 = vdwg.mxu0
    %v253 = vmax.f32 %v249, 0.0
    %v254 = vmax.f32 %v251, 0.0
    %v255 = vpack.c.bf16 %v254, %v253
    %v256 = vld [vmem:[#allocation2 + $0x110] sm:$0xf]
    %v257 = vld [vmem:[#allocation2 + $0x118] sm:$0xf]
    %v258 = vld [vmem:[#allocation2 + $0x120] sm:$0xf]
    %v259 = vld [vmem:[#allocation2 + $0x128] sm:$0xf]
    %v260 = vld [vmem:[#allocation2 + $0x130] sm:$0xf]
    %v261 = vld [vmem:[#allocation2 + $0x138] sm:$0xf]
    %v262 = vld [vmem:[#allocation2 + $0x140] sm:$0xf]
    %v263 = vld [vmem:[#allocation2 + $0x148] sm:$0xf]
    %v264 = vld [vmem:[#allocation2 + $0x150] sm:$0xf]
    %v265 = vld [vmem:[#allocation2 + $0x158] sm:$0xf]
    %v266 = vld [vmem:[#allocation2 + $0x160] sm:$0xf]
    %v267 = vld [vmem:[#allocation2 + $0x168] sm:$0xf]
    %v268 = vld [vmem:[#allocation2 + $0x170] sm:$0xf]
    %v269 = vld [vmem:[#allocation2 + $0x178] sm:$0xf]
    %v270 = vld [vmem:[#allocation2 + $0x180] sm:$0xf]
    %v271 = vld [vmem:[#allocation2 + $0x188] sm:$0xf]
    %v272 = vperm.slane %v31, 2
    %v289 = vunpack.c.l.b16 %v256
    %v290 = vunpack.c.l.b16 %v257
    %v291 = vunpack.c.l.b16 %v258
    %v292 = vunpack.c.l.b16 %v259
    %v293 = vunpack.c.l.b16 %v260
    %v294 = vunpack.c.l.b16 %v261
    %v295 = vunpack.c.l.b16 %v262
    %v296 = vunpack.c.l.b16 %v263
    %v297 = vunpack.c.l.b16 %v264
    %v298 = vunpack.c.l.b16 %v265
    %v299 = vunpack.c.l.b16 %v266
    %v300 = vunpack.c.l.b16 %v267
    %v301 = vunpack.c.l.b16 %v268
    %v302 = vunpack.c.l.b16 %v269
    %v303 = vunpack.c.l.b16 %v270
    %v304 = vunpack.c.l.b16 %v271
    %v305 = vpack.c.b16 %v290, %v289
    %v306 = vpack.c.b16 %v292, %v291
    %v307 = vpack.c.b16 %v294, %v293
    %v308 = vpack.c.b16 %v296, %v295
    %v309 = vpack.c.b16 %v298, %v297
    %v310 = vpack.c.b16 %v300, %v299
    %v311 = vpack.c.b16 %v302, %v301
    %v312 = vpack.c.b16 %v304, %v303
    %321 = vmatpush.bf16.msra.mxu0 %v312
    %322 = vmatpush.bf16.msra.mxu0 %v311
    %323 = vmatpush.bf16.msra.mxu0 %v310
    %324 = vmatpush.bf16.msra.mxu0 %v309
    %325 = vmatpush.bf16.msra.mxu0 %v308
    %326 = vmatpush.bf16.msra.mxu0 %v307
    %327 = vmatpush.bf16.msra.mxu0 %v306
    %328 = vmatpush.bf16.msra.mxu0 %v305
    %329 = vmatmul.bf16.gmra.mxu0 %v255
    %v330 = vpop.f32.mrf.mxu0
    %v331 = vadd.f32 %v272, %v330
    %v332 = vpop.f32.mrf.mxu0
    %v333 = vadd.f32 %v272, %v332
    %334 = vdwg.mxu0
    %v335 = vmax.f32 %v331, 0.0
    %v336 = vmax.f32 %v333, 0.0
    %v337 = vpack.c.bf16 %v336, %v335
    %v338 = vld [vmem:[#allocation2 + $0x190] sm:$0xf]
    %v339 = vld [vmem:[#allocation2 + $0x198] sm:$0xf]
    %v340 = vld [vmem:[#allocation2 + $0x1a0] sm:$0xf]
    %v341 = vld [vmem:[#allocation2 + $0x1a8] sm:$0xf]
    %v342 = vld [vmem:[#allocation2 + $0x1b0] sm:$0xf]
    %v343 = vld [vmem:[#allocation2 + $0x1b8] sm:$0xf]
    %v344 = vld [vmem:[#allocation2 + $0x1c0] sm:$0xf]
    %v345 = vld [vmem:[#allocation2 + $0x1c8] sm:$0xf]
    %v346 = vld [vmem:[#allocation2 + $0x1d0] sm:$0xf]
    %v347 = vld [vmem:[#allocation2 + $0x1d8] sm:$0xf]
    %v348 = vld [vmem:[#allocation2 + $0x1e0] sm:$0xf]
    %v349 = vld [vmem:[#allocation2 + $0x1e8] sm:$0xf]
    %v350 = vld [vmem:[#allocation2 + $0x1f0] sm:$0xf]
    %v351 = vld [vmem:[#allocation2 + $0x1f8] sm:$0xf]
    %v352 = vld [vmem:[#allocation2 + $0x200] sm:$0xf]
    %v353 = vld [vmem:[#allocation2 + $0x208] sm:$0xf]
    %v354 = vperm.slane %v31, 3
    %v371 = vunpack.c.l.b16 %v338
    %v372 = vunpack.c.l.b16 %v339
    %v373 = vunpack.c.l.b16 %v340
    %v374 = vunpack.c.l.b16 %v341
    %v375 = vunpack.c.l.b16 %v342
    %v376 = vunpack.c.l.b16 %v343
    %v377 = vunpack.c.l.b16 %v344
    %v378 = vunpack.c.l.b16 %v345
    %v379 = vunpack.c.l.b16 %v346
    %v380 = vunpack.c.l.b16 %v347
    %v381 = vunpack.c.l.b16 %v348
    %v382 = vunpack.c.l.b16 %v349
    %v383 = vunpack.c.l.b16 %v350
    %v384 = vunpack.c.l.b16 %v351
    %v385 = vunpack.c.l.b16 %v352
    %v386 = vunpack.c.l.b16 %v353
    %v387 = vpack.c.b16 %v372, %v371
    %v388 = vpack.c.b16 %v374, %v373
    %v389 = vpack.c.b16 %v376, %v375
    %v390 = vpack.c.b16 %v378, %v377
    %v391 = vpack.c.b16 %v380, %v379
    %v392 = vpack.c.b16 %v382, %v381
    %v393 = vpack.c.b16 %v384, %v383
    %v394 = vpack.c.b16 %v386, %v385
    %403 = vmatpush.bf16.msra.mxu0 %v394
    %404 = vmatpush.bf16.msra.mxu0 %v393
    %405 = vmatpush.bf16.msra.mxu0 %v392
    %406 = vmatpush.bf16.msra.mxu0 %v391
    %407 = vmatpush.bf16.msra.mxu0 %v390
    %408 = vmatpush.bf16.msra.mxu0 %v389
    %409 = vmatpush.bf16.msra.mxu0 %v388
    %410 = vmatpush.bf16.msra.mxu0 %v387
    %411 = vmatmul.bf16.gmra.mxu0 %v337
    %v412 = vpop.f32.mrf.mxu0
    %v413 = vadd.f32 %v354, %v412
    %v414 = vpop.f32.mrf.mxu0
    %v415 = vadd.f32 %v354, %v414
    %416 = vdwg.mxu0
    %v417 = vpack.c.bf16 %v413, %v413
    %v418 = vpack.c.bf16 %v415, %v415
    %419 = vst [vmem:[%s3] sm:$0xf] %v417
    %420 = vst [vmem:[%s3 + $0x4] sm:$0xf] %v418
    // Predicated region
    $region18: #{fwd.1} parent=1 // pred_check
      _
    $region19: #{fwd.1} parent=1 // pred_check_branch
      %422 = sbr.rel (0) target = $region21
    $region20: #{fwd.1} parent=1 // pred_region
      _
    $region21: #{fwd.1} parent=1 // pred_fallthru
      _
    // Predicated region
    $region22: #{fwd.1} parent=1 // pred_check
      _
    $region23: #{fwd.1} parent=1 // pred_check_branch
      %424 = sbr.rel (0) target = $region25
    $region24: #{fwd.1} parent=1 // pred_region
      _
    $region25: #{fwd.1} parent=1 // pred_fallthru
      _
    %425 = vsyncpa [#allocation3], 1

</llo_original>
